<compile_context>
chip_gen: v6e
topology: v6e:2x2x1
jax: 0.10.0
libtpu: 0.0.40
codegen_flags: <defaults>
</compile_context>

<pallas_src>
import jax
import jax.numpy as jnp
from jax.experimental import pallas as pl
from jax.experimental.pallas import tpu as pltpu

LANE = 128
VMEM_LIMIT = 48 * 1024 * 1024    # stays inside v7x's 64 MiB physical VMEM


def _round_up(v, m):
    return (v + m - 1) // m * m


def _pad2(a, rows, cols):
    return jnp.pad(a, ((0, rows - a.shape[0]), (0, cols - a.shape[1])))


def _pick_node_tiling(n_nodes):
    """Pick (n_pad, tm, tk): 512-wide tiles for big graphs, 128 for tiny ones."""
    if n_nodes > 384:
        tk = 512
    else:
        tk = 128
    n_pad = _round_up(n_nodes, tk)
    tm = tk
    # Prefer >= 2 row tiles so v7x's two TensorCores both get work.
    if n_pad // tm < 2 and tm > 128:
        tm //= 2
    return n_pad, tm, tk


# ---------------------------------------------------------------------------
# GCN aggregation kernel:  H = ReLU(dinv * (A_bin @ XW_scaled) + b)
#   (XW_scaled = dinv * (X @ W) is precomputed outside; dinv*.*dinv == gcn_norm)
# grid = (row tiles of A / output, reduction tiles over A columns)
# ---------------------------------------------------------------------------
def gcn_aggregate_kernel(xw_ref, a_ref, dinv_ref, b_ref, h_ref, acc_ref):
    k = pl.program_id(1)

    @pl.when(k == 0)
    def _():
        acc_ref[...] = jnp.zeros_like(acc_ref)

    # Single MXU push per grid step (XW recompute removed).
    acc_ref[...] += jnp.dot(a_ref[...], xw_ref[...],
                            preferred_element_type=jnp.float32)

    @pl.when(k == pl.num_programs(1) - 1)
    def _():
        h = acc_ref[...] * dinv_ref[...] + b_ref[...]
        h_ref[...] = jnp.maximum(h, 0.0).astype(h_ref.dtype)
        # dropout(p=0.5): eval-mode identity.


def gcn_aggregate(a_bin, xw_scaled, dinv_col, b, *, tm, tk):
    n = a_bin.shape[0]
    h = xw_scaled.shape[1]
    grid = (n // tm, n // tk)

    flops = 2 * n * n * h
    bytes_accessed = (a_bin.size * a_bin.dtype.itemsize                      # A stream
                      + xw_scaled.size * xw_scaled.dtype.itemsize * (n // tm)  # XW restream
                      + n * h * 2                                            # H writeback (bf16)
                      + n * 4 + h * 4)                                       # dinv + bias

    return pl.pallas_call(
        gcn_aggregate_kernel,
        out_shape=jax.ShapeDtypeStruct((n, h), jnp.bfloat16),
        grid_spec=pltpu.PrefetchScalarGridSpec(
            num_scalar_prefetch=0,
            grid=grid,
            in_specs=[
                pl.BlockSpec((tk, h), lambda i, k: (k, 0)),    # XW row-tile (bf16)
                pl.BlockSpec((tm, tk), lambda i, k: (i, k)),   # A_bin tile (bf16)
                pl.BlockSpec((tm, 1), lambda i, k: (i, 0)),    # dinv for output rows
                pl.BlockSpec((1, h), lambda i, k: (0, 0)),     # bias (resident)
            ],
            out_specs=pl.BlockSpec((tm, h), lambda i, k: (i, 0)),
            scratch_shapes=[pltpu.VMEM((tm, h), jnp.float32)],
        ),
        compiler_params=pltpu.CompilerParams(
            dimension_semantics=("parallel", "arbitrary"),
            vmem_limit_bytes=VMEM_LIMIT,
        ),
        cost_estimate=pl.CostEstimate(
            flops=flops, transcendentals=0, bytes_accessed=bytes_accessed),
    )(xw_scaled, a_bin, dinv_col, b)


# ---------------------------------------------------------------------------
# Head kernel:  out = (P @ H) @ Wfc + bfc   (global_mean_pool + Linear)
# grid = (reduction tiles over nodes,)
# ---------------------------------------------------------------------------
def pool_fc_kernel(p_ref, h_ref, wfc_ref, bfc_ref, out_ref, acc_ref):
    k = pl.program_id(0)

    @pl.when(k == 0)
    def _():
        acc_ref[...] = jnp.zeros_like(acc_ref)

    # bf16 x bf16 MXU dot, f32 accumulate.
    acc_ref[...] += jnp.dot(p_ref[...], h_ref[...],
                            preferred_element_type=jnp.float32)

    @pl.when(k == pl.num_programs(0) - 1)
    def _():
        out_ref[...] = (jnp.dot(acc_ref[...], wfc_ref[...],
                                preferred_element_type=jnp.float32)
                        + bfc_ref[...])


def pool_fc(pool, h, wfc, bfc, *, tk):
    g, n = pool.shape
    hid = h.shape[1]
    c = wfc.shape[1]
    grid = (n // tk,)

    return pl.pallas_call(
        pool_fc_kernel,
        out_shape=jax.ShapeDtypeStruct((g, c), jnp.float32),
        grid_spec=pltpu.PrefetchScalarGridSpec(
            num_scalar_prefetch=0,
            grid=grid,
            in_specs=[
                pl.BlockSpec((g, tk), lambda k: (0, k)),     # pooling col-tile (bf16)
                pl.BlockSpec((tk, hid), lambda k: (k, 0)),   # H row-tile (bf16)
                pl.BlockSpec((hid, c), lambda k: (0, 0)),    # Wfc (resident, f32)
                pl.BlockSpec((1, c), lambda k: (0, 0)),      # bfc
            ],
            out_specs=pl.BlockSpec((g, c), lambda k: (0, 0)),
            scratch_shapes=[pltpu.VMEM((g, hid), jnp.float32)],
        ),
        compiler_params=pltpu.CompilerParams(
            dimension_semantics=("arbitrary",),
            vmem_limit_bytes=VMEM_LIMIT,
        ),
    )(pool, h, wfc, bfc)


# ---------------------------------------------------------------------------
# Wrapper: binary adjacency + dinv + mean-pool matrix, padding, kernel calls.
# ---------------------------------------------------------------------------
def gcn_model_forward(x, edge_index, batch, params, num_graphs):
    w1, b1, w2, b2, wfc, bfc = params
    n_nodes, f_in = x.shape
    hid = w1.shape[1]
    c_out = wfc.shape[1]
    g = num_graphs

    src, dst = edge_index[0], edge_index[1]

    # Binary adjacency with self loops (normalization factored out -> exact in bf16).
    # NOTE: duplicate edges collapse to 1 (PyG scatter-add would sum them).
    a_bin = jnp.zeros((n_nodes, n_nodes), jnp.float32)
    a_bin = a_bin.at[dst, src].set(1.0)
    diag = jnp.arange(n_nodes)
    a_bin = a_bin.at[diag, diag].set(1.0)   # .set avoids 2.0 if self-loops already present
    deg = jnp.sum(a_bin, axis=1)
    dinv = jax.lax.rsqrt(jnp.maximum(deg, 1.0))

    # Mean-pool matrix P [G, N].
    onehot = (batch[None, :] == jnp.arange(g)[:, None]).astype(jnp.float32)
    counts = jnp.maximum(jnp.sum(onehot, axis=1, keepdims=True), 1.0)
    pool = onehot / counts

    # Lane-dense / tile-aligned padded shapes.
    n_pad, tm, tk = _pick_node_tiling(n_nodes)
    h_pad = _round_up(hid, LANE)
    c_pad = _round_up(c_out, LANE)
    g_pad = _round_up(g, 8)

    a_p = _pad2(a_bin, n_pad, n_pad).astype(jnp.bfloat16)
    dinv_p = jnp.pad(dinv, (0, n_pad - n_nodes)).reshape(n_pad, 1).astype(jnp.float32)
    pool_p = _pad2(pool, g_pad, n_pad).astype(jnp.bfloat16)

    b1_p = _pad2(b1, 1, h_pad).astype(jnp.float32)
    b2_p = _pad2(b2, 1, h_pad).astype(jnp.float32)
    w2_p = _pad2(w2, h_pad, h_pad).astype(jnp.bfloat16)
    wfc_p = _pad2(wfc, h_pad, c_pad).astype(jnp.float32)
    bfc_p = _pad2(bfc, 1, c_pad).astype(jnp.float32)

    # Layer 1: feature transform hoisted out of the grid, computed UNPADDED
    # (N x f_in @ f_in x hid), dinv folded in, then padded once.
    xw1 = jnp.dot(x, w1, preferred_element_type=jnp.float32) * dinv[:, None]
    xw1_p = _pad2(xw1, n_pad, h_pad).astype(jnp.bfloat16)
    h1 = gcn_aggregate(a_p, xw1_p, dinv_p, b1_p, tm=tm, tk=tk)   # [n_pad, h_pad] bf16

    # Layer 2: XW2 = H1 @ W2 hoisted the same way (tiny vs. the O(N^2) aggregate).
    xw2 = jnp.dot(h1, w2_p, preferred_element_type=jnp.float32) * dinv_p
    xw2_p = xw2.astype(jnp.bfloat16)
    h2 = gcn_aggregate(a_p, xw2_p, dinv_p, b2_p, tm=tm, tk=tk)   # [n_pad, h_pad] bf16

    # global_mean_pool + Linear head.
    out = pool_fc(pool_p, h2, wfc_p, bfc_p, tk=tk)               # [g_pad, c_pad] f32
    return out[:g, :c_out]


def init_params(key, n_input_features, hidden_dim, n_output_classes):
    k1, k2, k3, k4 = jax.random.split(key, 4)
    w1 = jax.random.normal(k1, (n_input_features, hidden_dim), jnp.float32) * 0.2
    b1 = jnp.zeros((1, hidden_dim), jnp.float32)
    w2 = jax.random.normal(k2, (hidden_dim, hidden_dim), jnp.float32) * 0.2
    b2 = jnp.zeros((1, hidden_dim), jnp.float32)
    wfc = jax.random.normal(k3, (hidden_dim, n_output_classes), jnp.float32) * 0.2
    bfc = jax.random.uniform(k4, (1, n_output_classes), jnp.float32,
                             minval=-0.1, maxval=0.1)
    return (w1, b1, w2, b2, wfc, bfc)


if __name__ == "__main__":
    key = jax.random.PRNGKey(0)
    kx, kp = jax.random.split(key)

    # Small synthetic batch: 16 nodes, 4 input features, hidden 128 (lane-dense),
    # 3 classes, 2 graphs (nodes 0..7 -> graph 0, nodes 8..15 -> graph 1).
    N, F_IN, HID, C_OUT, G = 16, 4, 128, 3, 2

    x = jax.random.normal(kx, (N, F_IN), jnp.float32)

    # Deterministic ring edges inside each graph (both directions).
    src0 = jnp.arange(8)
    dst0 = (src0 + 1) % 8
    src1 = jnp.arange(8) + 8
    dst1 = ((jnp.arange(8) + 1) % 8) + 8
    src = jnp.concatenate([src0, dst0, src1, dst1])
    dst = jnp.concatenate([dst0, src0, dst1, src1])
    edge_index = jnp.stack([src, dst]).astype(jnp.int32)     # [2, 32]

    batch = jnp.concatenate([jnp.zeros(8, jnp.int32), jnp.ones(8, jnp.int32)])

    params = init_params(kp, F_IN, HID, C_OUT)

    out = gcn_model_forward(x, edge_index, batch, params, num_graphs=G)
    out = jax.block_until_ready(out)
    assert out.shape == (G, C_OUT)
    assert bool(jnp.all(jnp.isfinite(out)))
    print("KERNEL_OK")
</pallas_src>

<mosaic_0001>
module attributes {stable_mosaic.version = 11 : i64} {
  func.func @gcn_aggregate_kernel(%arg0: i32, %arg1: i32, %arg2: memref<128x128xbf16, #tpu.memory_space<vmem>>, %arg3: memref<128x128xbf16, #tpu.memory_space<vmem>>, %arg4: memref<128x1xf32, #tpu.memory_space<vmem>>, %arg5: memref<1x128xf32, #tpu.memory_space<vmem>>, %arg6: memref<128x128xbf16, #tpu.memory_space<vmem>>, %arg7: memref<128x128xf32, #tpu.memory_space<vmem>>) attributes {dimension_semantics = [#tpu.dimension_semantics<parallel>, #tpu.dimension_semantics<arbitrary>], iteration_bounds = array<i64: 1, 1>, scalar_prefetch = 0 : i64, scratch_operands = 1 : i64, tpu.core_type = #tpu.core_type<tc>, window_params = [{transform_indices = @transform_0, window_bounds = array<i64: 128, 128>}, {transform_indices = @transform_1, window_bounds = array<i64: 128, 128>}, {transform_indices = @transform_2, window_bounds = array<i64: 128, 1>}, {pipeline_mode = #tpu.pipeline_mode<synchronous>, transform_indices = @transform_3, window_bounds = array<i64: 1, 128>}, {transform_indices = @transform_4, window_bounds = array<i64: 128, 128>}]} {
    %c0_i32 = arith.constant 0 : i32
    %0 = arith.cmpi eq, %arg1, %c0_i32 : i32
    %1 = arith.extui %0 : i1 to i32
    %c0_i32_0 = arith.constant 0 : i32
    %2 = arith.cmpi ne, %1, %c0_i32_0 : i32
    scf.if %2 {
      %cst_10 = arith.constant 0.000000e+00 : f32
      %12 = vector.broadcast %cst_10 : f32 to vector<128x128xf32>
      %c0_11 = arith.constant 0 : index
      %c0_12 = arith.constant 0 : index
      %13 = vector.load %arg7[%c0_11, %c0_12] : memref<128x128xf32, #tpu.memory_space<vmem>>, vector<128x128xf32>
      tpu.vector_store %arg7[%c0_11, %c0_12], %12 {strides = array<i32>} : memref<128x128xf32, #tpu.memory_space<vmem>>, vector<128x128xf32>,
    } else {
    }
    %c0 = arith.constant 0 : index
    %c0_1 = arith.constant 0 : index
    %3 = vector.load %arg7[%c0, %c0_1] : memref<128x128xf32, #tpu.memory_space<vmem>>, vector<128x128xf32>
    %c0_2 = arith.constant 0 : index
    %c0_3 = arith.constant 0 : index
    %4 = vector.load %arg3[%c0_2, %c0_3] : memref<128x128xbf16, #tpu.memory_space<vmem>>, vector<128x128xbf16>
    %c0_4 = arith.constant 0 : index
    %c0_5 = arith.constant 0 : index
    %5 = vector.load %arg2[%c0_4, %c0_5] : memref<128x128xbf16, #tpu.memory_space<vmem>>, vector<128x128xbf16>
    %cst = arith.constant dense<0.000000e+00> : vector<128x128xf32>
    %6 = tpu.matmul %4, %5, %cst {dimension_numbers = #tpu.dot_dimension_numbers<[1], [0], [0], [1], [0, 0, 1, 1], [], []>} : vector<128x128xbf16>, vector<128x128xbf16>, vector<128x128xf32> -> vector<128x128xf32>
    %7 = arith.addf %3, %6 : vector<128x128xf32>
    %c0_6 = arith.constant 0 : index
    %c0_7 = arith.constant 0 : index
    %8 = vector.load %arg7[%c0_6, %c0_7] : memref<128x128xf32, #tpu.memory_space<vmem>>, vector<128x128xf32>
    tpu.vector_store %arg7[%c0_6, %c0_7], %7 {strides = array<i32>} : memref<128x128xf32, #tpu.memory_space<vmem>>, vector<128x128xf32>,
    %c0_i32_8 = arith.constant 0 : i32
    %9 = arith.cmpi eq, %arg1, %c0_i32_8 : i32
    %10 = arith.extui %9 : i1 to i32
    %c0_i32_9 = arith.constant 0 : i32
    %11 = arith.cmpi ne, %10, %c0_i32_9 : i32
    scf.if %11 {
      %c0_10 = arith.constant 0 : index
      %c0_11 = arith.constant 0 : index
      %12 = vector.load %arg7[%c0_10, %c0_11] : memref<128x128xf32, #tpu.memory_space<vmem>>, vector<128x128xf32>
      %c0_12 = arith.constant 0 : index
      %c0_13 = arith.constant 0 : index
      %13 = vector.load %arg4[%c0_12, %c0_13] : memref<128x1xf32, #tpu.memory_space<vmem>>, vector<128x1xf32>
      %14 = vector.broadcast %13 : vector<128x1xf32> to vector<128x128xf32>
      %15 = arith.mulf %12, %14 : vector<128x128xf32>
      %c0_14 = arith.constant 0 : index
      %c0_15 = arith.constant 0 : index
      %16 = vector.load %arg5[%c0_14, %c0_15] : memref<1x128xf32, #tpu.memory_space<vmem>>, vector<1x128xf32>
      %17 = vector.broadcast %16 : vector<1x128xf32> to vector<128x128xf32>
      %18 = arith.addf %15, %17 : vector<128x128xf32>
      %cst_16 = arith.constant 0.000000e+00 : f32
      %19 = vector.broadcast %cst_16 : f32 to vector<128x128xf32>
      %20 = arith.maximumf %18, %19 : vector<128x128xf32>
      %21 = arith.truncf %20 : vector<128x128xf32> to vector<128x128xbf16>
      %c0_17 = arith.constant 0 : index
      %c0_18 = arith.constant 0 : index
      %22 = vector.load %arg6[%c0_17, %c0_18] : memref<128x128xbf16, #tpu.memory_space<vmem>>, vector<128x128xbf16>
      tpu.vector_store %arg6[%c0_17, %c0_18], %21 {strides = array<i32>} : memref<128x128xbf16, #tpu.memory_space<vmem>>, vector<128x128xbf16>,
    } else {
    }
    return
  }
  func.func @transform_0(%arg0: i32, %arg1: i32) -> (i32, i32) {
    %c0_i32 = arith.constant 0 : i32
    %c0_i32_0 = arith.constant 0 : i32
    return %arg1, %c0_i32 : i32, i32
  }
  func.func @transform_1(%arg0: i32, %arg1: i32) -> (i32, i32) {
    %c0_i32 = arith.constant 0 : i32
    return %arg0, %arg1 : i32, i32
  }
  func.func @transform_2(%arg0: i32, %arg1: i32) -> (i32, i32) {
    %c0_i32 = arith.constant 0 : i32
    %c0_i32_0 = arith.constant 0 : i32
    return %arg0, %c0_i32 : i32, i32
  }
  func.func @transform_3(%arg0: i32, %arg1: i32) -> (i32, i32) {
    %c0_i32 = arith.constant 0 : i32
    %c0_i32_0 = arith.constant 0 : i32
    %c0_i32_1 = arith.constant 0 : i32
    return %c0_i32, %c0_i32_0 : i32, i32
  }
  func.func @transform_4(%arg0: i32, %arg1: i32) -> (i32, i32) {
    %c0_i32 = arith.constant 0 : i32
    %c0_i32_0 = arith.constant 0 : i32
    return %arg0, %c0_i32 : i32, i32
  }
}

</mosaic_0001>

<llo_original>
// kernel: tpu_custom_call.1
$region0: #{tpu_custom_call.1}
  #allocation0 [shape = 'u32[]', space=smem, size = 0x4, offset = 0x4, fixed_abs, tag = 'smem constant byte address 0x4 - core index']
  #allocation1 [shape = 'u32[144,128]{1,0:T(1,128)}', space=vmem, size = 0x12000, scoped, tag = 'internal scratch']
  #allocation2 [shape = 'f32[128,128]{1,0:T(8,128)}', space=vmem, size = 0x10000, scoped, tag = 'scratch operand']
  %s0 = inlined_call_operand.vmem [shape: bf16[128,128], index: 0, kind: input, shape index: {}]
  %s1 = inlined_call_operand.vmem [shape: bf16[128,128], index: 1, kind: input, shape index: {}]
  %s2 = inlined_call_operand.vmem [shape: f32[128,1], index: 2, kind: input, shape index: {}]
  %s3 = inlined_call_operand.vmem [shape: f32[1,128], index: 3, kind: input, shape index: {}]
  %s4 = inlined_call_operand.hbm [shape: bf16[128,128], index: 4, kind: output, shape index: {}]
  %s5 = sld [smem:[#allocation0]]
  $region34: #{tpu_custom_call.1} parent=0
    _
  %s7 = ssub.s32 1, %s5
  %s8 = scalar_select 0, %s7, %s5
  $region1: #{tpu_custom_call.1} parent=0
    #allocation3 [shape = 'u8[32768]{0}', space=vmem, size = 0x8000, scoped, tag = 'output window, operand 0, single buffered']
    #allocation4 [shape = 's32[1]{0}', space=sflag, size = 0x4, scoped, tag = 'scoped memory for tpu_custom_call.1']
    %9 = vsyncpa [#allocation4], 0
    // Predicated region
    $region2: #{tpu_custom_call.1} parent=1 // pred_check
      _
    $region3: #{tpu_custom_call.1} parent=1 // pred_check_branch
      %11 = sbr.rel (0) target = $region5
    $region4: #{tpu_custom_call.1} parent=1 // pred_region
      _
    $region5: #{tpu_custom_call.1} parent=1 // pred_fallthru
      _
    // Predicated region
    $region6: #{tpu_custom_call.1} parent=1 // pred_check
      _
    $region7: #{tpu_custom_call.1} parent=1 // pred_check_branch
      %13 = sbr.rel (0) target = $region9
    $region8: #{tpu_custom_call.1} parent=1 // pred_region
      _
    $region9: #{tpu_custom_call.1} parent=1 // pred_fallthru
      _
    // Predicated region
    $region10: #{tpu_custom_call.1} parent=1 // pred_check
      _
    $region11: #{tpu_custom_call.1} parent=1 // pred_check_branch
      %15 = sbr.rel (0) target = $region13
    $region12: #{tpu_custom_call.1} parent=1 // pred_region
      _
    $region13: #{tpu_custom_call.1} parent=1 // pred_fallthru
      _
    // Predicated region
    $region14: #{tpu_custom_call.1} parent=1 // pred_check
      _
    $region15: #{tpu_custom_call.1} parent=1 // pred_check_branch
      %17 = sbr.rel (0) target = $region17
    $region16: #{tpu_custom_call.1} parent=1 // pred_region
      _
    $region17: #{tpu_custom_call.1} parent=1 // pred_fallthru
      _
    %p19 = scmp.eq.s32.totalorder 0, 0
    // Predicated region
    $region18: #{tpu_custom_call.1} parent=1 // pred_check
      %p20 = pneg %p19
    $region19: #{tpu_custom_call.1} parent=1 // pred_check_branch
      %22 = sbr.rel (%p20) target = $region21
    $region20: #{tpu_custom_call.1} parent=1 // pred_region
      %23 = vst [vmem:[#allocation2] sm:$0xff] 0.0
      %24 = vst [vmem:[#allocation2 + $0x8] sm:$0xff] 0.0
      %25 = vst [vmem:[#allocation2 + $0x10] sm:$0xff] 0.0
      %26 = vst [vmem:[#allocation2 + $0x18] sm:$0xff] 0.0
      %27 = vst [vmem:[#allocation2 + $0x20] sm:$0xff] 0.0
      %28 = vst [vmem:[#allocation2 + $0x28] sm:$0xff] 0.0
      %29 = vst [vmem:[#allocation2 + $0x30] sm:$0xff] 0.0
      %30 = vst [vmem:[#allocation2 + $0x38] sm:$0xff] 0.0
      %31 = vst [vmem:[#allocation2 + $0x40] sm:$0xff] 0.0
      %32 = vst [vmem:[#allocation2 + $0x48] sm:$0xff] 0.0
      %33 = vst [vmem:[#allocation2 + $0x50] sm:$0xff] 0.0
      %34 = vst [vmem:[#allocation2 + $0x58] sm:$0xff] 0.0
      %35 = vst [vmem:[#allocation2 + $0x60] sm:$0xff] 0.0
      %36 = vst [vmem:[#allocation2 + $0x68] sm:$0xff] 0.0
      %37 = vst [vmem:[#allocation2 + $0x70] sm:$0xff] 0.0
      %38 = vst [vmem:[#allocation2 + $0x78] sm:$0xff] 0.0
    $region21: #{tpu_custom_call.1} parent=1 // pred_fallthru
      _
    %v39 = vld [vmem:[#allocation2] sm:$0xff]
    %v40 = vld [vmem:[#allocation2 + $0x8] sm:$0xff]
    %v41 = vld [vmem:[#allocation2 + $0x10] sm:$0xff]
    %v42 = vld [vmem:[#allocation2 + $0x18] sm:$0xff]
    %v43 = vld [vmem:[#allocation2 + $0x20] sm:$0xff]
    %v44 = vld [vmem:[#allocation2 + $0x28] sm:$0xff]
    %v45 = vld [vmem:[#allocation2 + $0x30] sm:$0xff]
    %v46 = vld [vmem:[#allocation2 + $0x38] sm:$0xff]
    %v47 = vld [vmem:[#allocation2 + $0x40] sm:$0xff]
    %v48 = vld [vmem:[#allocation2 + $0x48] sm:$0xff]
    %v49 = vld [vmem:[#allocation2 + $0x50] sm:$0xff]
    %v50 = vld [vmem:[#allocation2 + $0x58] sm:$0xff]
    %v51 = vld [vmem:[#allocation2 + $0x60] sm:$0xff]
    %v52 = vld [vmem:[#allocation2 + $0x68] sm:$0xff]
    %v53 = vld [vmem:[#allocation2 + $0x70] sm:$0xff]
    %v54 = vld [vmem:[#allocation2 + $0x78] sm:$0xff]
    %v55 = vld [vmem:[%s1] sm:$0xf]
    %v56 = vld [vmem:[%s1 + $0x4] sm:$0xf]
    %v57 = vld [vmem:[%s1 + $0x8] sm:$0xf]
    %v58 = vld [vmem:[%s1 + $0xc] sm:$0xf]
    %v59 = vld [vmem:[%s1 + $0x10] sm:$0xf]
    %v60 = vld [vmem:[%s1 + $0x14] sm:$0xf]
    %v61 = vld [vmem:[%s1 + $0x18] sm:$0xf]
    %v62 = vld [vmem:[%s1 + $0x1c] sm:$0xf]
    %v63 = vld [vmem:[%s1 + $0x20] sm:$0xf]
    %v64 = vld [vmem:[%s1 + $0x24] sm:$0xf]
    %v65 = vld [vmem:[%s1 + $0x28] sm:$0xf]
    %v66 = vld [vmem:[%s1 + $0x2c] sm:$0xf]
    %v67 = vld [vmem:[%s1 + $0x30] sm:$0xf]
    %v68 = vld [vmem:[%s1 + $0x34] sm:$0xf]
    %v69 = vld [vmem:[%s1 + $0x38] sm:$0xf]
    %v70 = vld [vmem:[%s1 + $0x3c] sm:$0xf]
    %v71 = vld [vmem:[%s0] sm:$0xf]
    %v72 = vld [vmem:[%s0 + $0x4] sm:$0xf]
    %v73 = vld [vmem:[%s0 + $0x8] sm:$0xf]
    %v74 = vld [vmem:[%s0 + $0xc] sm:$0xf]
    %v75 = vld [vmem:[%s0 + $0x10] sm:$0xf]
    %v76 = vld [vmem:[%s0 + $0x14] sm:$0xf]
    %v77 = vld [vmem:[%s0 + $0x18] sm:$0xf]
    %v78 = vld [vmem:[%s0 + $0x1c] sm:$0xf]
    %v79 = vld [vmem:[%s0 + $0x20] sm:$0xf]
    %v80 = vld [vmem:[%s0 + $0x24] sm:$0xf]
    %v81 = vld [vmem:[%s0 + $0x28] sm:$0xf]
    %v82 = vld [vmem:[%s0 + $0x2c] sm:$0xf]
    %v83 = vld [vmem:[%s0 + $0x30] sm:$0xf]
    %v84 = vld [vmem:[%s0 + $0x34] sm:$0xf]
    %v85 = vld [vmem:[%s0 + $0x38] sm:$0xf]
    %v86 = vld [vmem:[%s0 + $0x3c] sm:$0xf]
    %v103 = vunpack.c.l.b16 %v55
    %v104 = vunpack.c.l.b16 %v56
    %v105 = vunpack.c.l.b16 %v57
    %v106 = vunpack.c.l.b16 %v58
    %v107 = vunpack.c.l.b16 %v59
    %v108 = vunpack.c.l.b16 %v60
    %v109 = vunpack.c.l.b16 %v61
    %v110 = vunpack.c.l.b16 %v62
    %v111 = vunpack.c.l.b16 %v63
    %v112 = vunpack.c.l.b16 %v64
    %v113 = vunpack.c.l.b16 %v65
    %v114 = vunpack.c.l.b16 %v66
    %v115 = vunpack.c.l.b16 %v67
    %v116 = vunpack.c.l.b16 %v68
    %v117 = vunpack.c.l.b16 %v69
    %v118 = vunpack.c.l.b16 %v70
    %v119 = vpack.c.b16 %v104, %v103
    %v120 = vpack.c.b16 %v106, %v105
    %v121 = vpack.c.b16 %v108, %v107
    %v122 = vpack.c.b16 %v110, %v109
    %v123 = vpack.c.b16 %v112, %v111
    %v124 = vpack.c.b16 %v114, %v113
    %v125 = vpack.c.b16 %v116, %v115
    %v126 = vpack.c.b16 %v118, %v117
    %v151 = vunpack.c.l.b16 %v71
    %v152 = vunpack.c.l.b16 %v72
    %v153 = vunpack.c.l.b16 %v73
    %v154 = vunpack.c.l.b16 %v74
    %v155 = vunpack.c.l.b16 %v75
    %v156 = vunpack.c.l.b16 %v76
    %v157 = vunpack.c.l.b16 %v77
    %v158 = vunpack.c.l.b16 %v78
    %v159 = vunpack.c.l.b16 %v79
    %v160 = vunpack.c.l.b16 %v80
    %v161 = vunpack.c.l.b16 %v81
    %v162 = vunpack.c.l.b16 %v82
    %v163 = vunpack.c.l.b16 %v83
    %v164 = vunpack.c.l.b16 %v84
    %v165 = vunpack.c.l.b16 %v85
    %v166 = vunpack.c.l.b16 %v86
    %v167 = vpack.c.b16 %v152, %v151
    %v168 = vpack.c.b16 %v154, %v153
    %v169 = vpack.c.b16 %v156, %v155
    %v170 = vpack.c.b16 %v158, %v157
    %v171 = vpack.c.b16 %v160, %v159
    %v172 = vpack.c.b16 %v162, %v161
    %v173 = vpack.c.b16 %v164, %v163
    %v174 = vpack.c.b16 %v166, %v165
    %183 = vmatprep.subr.bf16.mxu0 0
    %184 = vmatpush1.bf16.msra.mxu0 %v174
    %185 = vmatprep.subr.bf16.mxu0 0
    %186 = vmatpush1.bf16.msra.mxu0 %v173
    %187 = vmatprep.subr.bf16.mxu0 0
    %188 = vmatpush1.bf16.msra.mxu0 %v172
    %189 = vmatprep.subr.bf16.mxu0 0
    %190 = vmatpush1.bf16.msra.mxu0 %v171
    %191 = vmatprep.subr.bf16.mxu0 0
    %192 = vmatpush1.bf16.msra.mxu0 %v170
    %193 = vmatprep.subr.bf16.mxu0 0
    %194 = vmatpush1.bf16.msra.mxu0 %v169
    %195 = vmatprep.subr.bf16.mxu0 0
    %196 = vmatpush1.bf16.msra.mxu0 %v168
    %197 = vmatprep.subr.bf16.mxu0 0
    %198 = vmatpush1.bf16.msra.mxu0 %v167
    %199 = vmatprep.subr.bf16.mxu0 0
    %200 = vmatpush2.bf16.msra.mxu0 0
    %201 = vmatprep.subr.bf16.mxu0 0
    %202 = vmatpush2.bf16.msra.mxu0 0
    %203 = vmatprep.subr.bf16.mxu0 0
    %204 = vmatpush2.bf16.msra.mxu0 0
    %205 = vmatprep.subr.bf16.mxu0 0
    %206 = vmatpush2.bf16.msra.mxu0 0
    %207 = vmatprep.subr.bf16.mxu0 0
    %208 = vmatpush2.bf16.msra.mxu0 0
    %209 = vmatprep.subr.bf16.mxu0 0
    %210 = vmatpush2.bf16.msra.mxu0 0
    %211 = vmatprep.subr.bf16.mxu0 0
    %212 = vmatpush2.bf16.msra.mxu0 0
    %213 = vmatprep.subr.bf16.mxu0 0
    %214 = vmatpush2.bf16.msra.mxu0 0
    %215 = vmatprep.mubr.bf16.mxu0 0
    %216 = vmatmul.mubr.bf16.gmra.mxu0 %v119
    %v217 = vpop.f32.mrf.mxu0
    %v218 = vadd.f32 0.0, %v217
    %v219 = vpop.f32.mrf.mxu0
    %v220 = vpop.f32.mrf.mxu0
    %v221 = vadd.f32 0.0, %v220
    %v222 = vpop.f32.mrf.mxu0
    %223 = vmatprep.mubr.bf16.mxu0 0
    %224 = vmatmul.mubr.bf16.gmra.mxu0 %v120
    %v225 = vpop.f32.mrf.mxu0
    %v226 = vadd.f32 0.0, %v225
    %v227 = vpop.f32.mrf.mxu0
    %v228 = vpop.f32.mrf.mxu0
    %v229 = vadd.f32 0.0, %v228
    %v230 = vpop.f32.mrf.mxu0
    %231 = vmatprep.mubr.bf16.mxu0 0
    %232 = vmatmul.mubr.bf16.gmra.mxu0 %v121
    %v233 = vpop.f32.mrf.mxu0
    %v234 = vadd.f32 0.0, %v233
    %v235 = vpop.f32.mrf.mxu0
    %v236 = vpop.f32.mrf.mxu0
    %v237 = vadd.f32 0.0, %v236
    %v238 = vpop.f32.mrf.mxu0
    %239 = vmatprep.mubr.bf16.mxu0 0
    %240 = vmatmul.mubr.bf16.gmra.mxu0 %v122
    %v241 = vpop.f32.mrf.mxu0
    %v242 = vadd.f32 0.0, %v241
    %v243 = vpop.f32.mrf.mxu0
    %v244 = vpop.f32.mrf.mxu0
    %v245 = vadd.f32 0.0, %v244
    %v246 = vpop.f32.mrf.mxu0
    %247 = vmatprep.mubr.bf16.mxu0 0
    %248 = vmatmul.mubr.bf16.gmra.mxu0 %v123
    %v249 = vpop.f32.mrf.mxu0
    %v250 = vadd.f32 0.0, %v249
    %v251 = vpop.f32.mrf.mxu0
    %v252 = vpop.f32.mrf.mxu0
    %v253 = vadd.f32 0.0, %v252
    %v254 = vpop.f32.mrf.mxu0
    %255 = vmatprep.mubr.bf16.mxu0 0
    %256 = vmatmul.mubr.bf16.gmra.mxu0 %v124
    %v257 = vpop.f32.mrf.mxu0
    %v258 = vadd.f32 0.0, %v257
    %v259 = vpop.f32.mrf.mxu0
    %v260 = vpop.f32.mrf.mxu0
    %v261 = vadd.f32 0.0, %v260
    %v262 = vpop.f32.mrf.mxu0
    %263 = vmatprep.mubr.bf16.mxu0 0
    %264 = vmatmul.mubr.bf16.gmra.mxu0 %v125
    %v265 = vpop.f32.mrf.mxu0
    %v266 = vadd.f32 0.0, %v265
    %v267 = vpop.f32.mrf.mxu0
    %v268 = vpop.f32.mrf.mxu0
    %v269 = vadd.f32 0.0, %v268
    %v270 = vpop.f32.mrf.mxu0
    %271 = vmatprep.mubr.bf16.mxu0 0
    %272 = vmatmul.mubr.bf16.gmra.mxu0 %v126
    %v273 = vpop.f32.mrf.mxu0
    %v274 = vadd.f32 0.0, %v273
    %v275 = vpop.f32.mrf.mxu0
    %v276 = vpop.f32.mrf.mxu0
    %v277 = vadd.f32 0.0, %v276
    %v278 = vpop.f32.mrf.mxu0
    %279 = vdwg.mxu0
    %v280 = vadd.f32 %v39, %v218
    %v281 = vadd.f32 %v40, %v221
    %v282 = vadd.f32 %v41, %v226
    %v283 = vadd.f32 %v42, %v229
    %v284 = vadd.f32 %v43, %v234
    %v285 = vadd.f32 %v44, %v237
    %v286 = vadd.f32 %v45, %v242
    %v287 = vadd.f32 %v46, %v245
    %v288 = vadd.f32 %v47, %v250
    %v289 = vadd.f32 %v48, %v253
    %v290 = vadd.f32 %v49, %v258
    %v291 = vadd.f32 %v50, %v261
    %v292 = vadd.f32 %v51, %v266
    %v293 = vadd.f32 %v52, %v269
    %v294 = vadd.f32 %v53, %v274
    %v295 = vadd.f32 %v54, %v277
    %296 = vst [vmem:[#allocation2] sm:$0xff] %v280
    %297 = vst [vmem:[#allocation2 + $0x8] sm:$0xff] %v281
    %298 = vst [vmem:[#allocation2 + $0x10] sm:$0xff] %v282
    %299 = vst [vmem:[#allocation2 + $0x18] sm:$0xff] %v283
    %300 = vst [vmem:[#allocation2 + $0x20] sm:$0xff] %v284
    %301 = vst [vmem:[#allocation2 + $0x28] sm:$0xff] %v285
    %302 = vst [vmem:[#allocation2 + $0x30] sm:$0xff] %v286
    %303 = vst [vmem:[#allocation2 + $0x38] sm:$0xff] %v287
    %304 = vst [vmem:[#allocation2 + $0x40] sm:$0xff] %v288
    %305 = vst [vmem:[#allocation2 + $0x48] sm:$0xff] %v289
    %306 = vst [vmem:[#allocation2 + $0x50] sm:$0xff] %v290
    %307 = vst [vmem:[#allocation2 + $0x58] sm:$0xff] %v291
    %308 = vst [vmem:[#allocation2 + $0x60] sm:$0xff] %v292
    %309 = vst [vmem:[#allocation2 + $0x68] sm:$0xff] %v293
    %310 = vst [vmem:[#allocation2 + $0x70] sm:$0xff] %v294
    %311 = vst [vmem:[#allocation2 + $0x78] sm:$0xff] %v295
    // Predicated region
    $region22: #{tpu_custom_call.1} parent=1 // pred_check
      %p312 = pneg %p19
    $region23: #{tpu_custom_call.1} parent=1 // pred_check_branch
      %314 = sbr.rel (%p312) target = $region25
    $region24: #{tpu_custom_call.1} parent=1 // pred_region
      %v315 = vld [vmem:[#allocation2] sm:$0xff]
      %v316 = vld [vmem:[#allocation2 + $0x8] sm:$0xff]
      %v317 = vld [vmem:[#allocation2 + $0x10] sm:$0xff]
      %v318 = vld [vmem:[#allocation2 + $0x18] sm:$0xff]
      %v319 = vld [vmem:[#allocation2 + $0x20] sm:$0xff]
      %v320 = vld [vmem:[#allocation2 + $0x28] sm:$0xff]
      %v321 = vld [vmem:[#allocation2 + $0x30] sm:$0xff]
      %v322 = vld [vmem:[#allocation2 + $0x38] sm:$0xff]
      %v323 = vld [vmem:[#allocation2 + $0x40] sm:$0xff]
      %v324 = vld [vmem:[#allocation2 + $0x48] sm:$0xff]
      %v325 = vld [vmem:[#allocation2 + $0x50] sm:$0xff]
      %v326 = vld [vmem:[#allocation2 + $0x58] sm:$0xff]
      %v327 = vld [vmem:[#allocation2 + $0x60] sm:$0xff]
      %v328 = vld [vmem:[#allocation2 + $0x68] sm:$0xff]
      %v329 = vld [vmem:[#allocation2 + $0x70] sm:$0xff]
      %v330 = vld [vmem:[#allocation2 + $0x78] sm:$0xff]
      %v331 = vld [vmem:[%s2] sm:$0xff]
      %v332 = vld [vmem:[%s2 + $0x8] sm:$0xff]
      %v333 = vld [vmem:[%s2 + $0x10] sm:$0xff]
      %v334 = vld [vmem:[%s2 + $0x18] sm:$0xff]
      %v335 = vld [vmem:[%s2 + $0x20] sm:$0xff]
      %v336 = vld [vmem:[%s2 + $0x28] sm:$0xff]
      %v337 = vld [vmem:[%s2 + $0x30] sm:$0xff]
      %v338 = vld [vmem:[%s2 + $0x38] sm:$0xff]
      %v339 = vld [vmem:[%s2 + $0x40] sm:$0xff]
      %v340 = vld [vmem:[%s2 + $0x48] sm:$0xff]
      %v341 = vld [vmem:[%s2 + $0x50] sm:$0xff]
      %v342 = vld [vmem:[%s2 + $0x58] sm:$0xff]
      %v343 = vld [vmem:[%s2 + $0x60] sm:$0xff]
      %v344 = vld [vmem:[%s2 + $0x68] sm:$0xff]
      %v345 = vld [vmem:[%s2 + $0x70] sm:$0xff]
      %v346 = vld [vmem:[%s2 + $0x78] sm:$0xff]
      %348 = vset.pattern.permute.xlu0 0
      %349 = vperm.xlu0 %348, %v331
      %v350 = vpop.permute.xlu0 %349
      %353 = vset.pattern.permute.xlu0 0
      %354 = vperm.xlu0 %353, %v332
      %v355 = vpop.permute.xlu0 %354
      %358 = vset.pattern.permute.xlu0 0
      %359 = vperm.xlu0 %358, %v333
      %v360 = vpop.permute.xlu0 %359
      %363 = vset.pattern.permute.xlu0 0
      %364 = vperm.xlu0 %363, %v334
      %v365 = vpop.permute.xlu0 %364
      %368 = vset.pattern.permute.xlu0 0
      %369 = vperm.xlu0 %368, %v335
      %v370 = vpop.permute.xlu0 %369
      %373 = vset.pattern.permute.xlu0 0
      %374 = vperm.xlu0 %373, %v336
      %v375 = vpop.permute.xlu0 %374
      %378 = vset.pattern.permute.xlu0 0
      %379 = vperm.xlu0 %378, %v337
      %v380 = vpop.permute.xlu0 %379
      %383 = vset.pattern.permute.xlu0 0
      %384 = vperm.xlu0 %383, %v338
      %v385 = vpop.permute.xlu0 %384
      %388 = vset.pattern.permute.xlu0 0
      %389 = vperm.xlu0 %388, %v339
      %v390 = vpop.permute.xlu0 %389
      %393 = vset.pattern.permute.xlu0 0
      %394 = vperm.xlu0 %393, %v340
      %v395 = vpop.permute.xlu0 %394
      %398 = vset.pattern.permute.xlu0 0
      %399 = vperm.xlu0 %398, %v341
      %v400 = vpop.permute.xlu0 %399
      %403 = vset.pattern.permute.xlu0 0
      %404 = vperm.xlu0 %403, %v342
      %v405 = vpop.permute.xlu0 %404
      %408 = vset.pattern.permute.xlu0 0
      %409 = vperm.xlu0 %408, %v343
      %v410 = vpop.permute.xlu0 %409
      %413 = vset.pattern.permute.xlu0 0
      %414 = vperm.xlu0 %413, %v344
      %v415 = vpop.permute.xlu0 %414
      %418 = vset.pattern.permute.xlu0 0
      %419 = vperm.xlu0 %418, %v345
      %v420 = vpop.permute.xlu0 %419
      %423 = vset.pattern.permute.xlu0 0
      %424 = vperm.xlu0 %423, %v346
      %v425 = vpop.permute.xlu0 %424
      %v427 = vmul.f32 %v315, %v350
      %v428 = vmul.f32 %v316, %v355
      %v429 = vmul.f32 %v317, %v360
      %v430 = vmul.f32 %v318, %v365
      %v431 = vmul.f32 %v319, %v370
      %v432 = vmul.f32 %v320, %v375
      %v433 = vmul.f32 %v321, %v380
      %v434 = vmul.f32 %v322, %v385
      %v435 = vmul.f32 %v323, %v390
      %v436 = vmul.f32 %v324, %v395
      %v437 = vmul.f32 %v325, %v400
      %v438 = vmul.f32 %v326, %v405
      %v439 = vmul.f32 %v327, %v410
      %v440 = vmul.f32 %v328, %v415
      %v441 = vmul.f32 %v329, %v420
      %v442 = vmul.f32 %v330, %v425
      %v443 = vld [vmem:[%s3] sm:$0x1]
      %v445 = vlaneseq
      %v446 = vshrl.u32 %v445, 7
      %v447 = vsub.s32 0, %v446
      %v448 = vrot.slane %v443, %v447
      %v450 = vadd.f32 %v427, %v448
      %v451 = vadd.f32 %v428, %v448
      %v452 = vadd.f32 %v429, %v448
      %v453 = vadd.f32 %v430, %v448
      %v454 = vadd.f32 %v431, %v448
      %v455 = vadd.f32 %v432, %v448
      %v456 = vadd.f32 %v433, %v448
      %v457 = vadd.f32 %v434, %v448
      %v458 = vadd.f32 %v435, %v448
      %v459 = vadd.f32 %v436, %v448
      %v460 = vadd.f32 %v437, %v448
      %v461 = vadd.f32 %v438, %v448
      %v462 = vadd.f32 %v439, %v448
      %v463 = vadd.f32 %v440, %v448
      %v464 = vadd.f32 %v441, %v448
      %v465 = vadd.f32 %v442, %v448
      %v466 = vmax.f32 %v450, 0.0
      %v467 = vmax.f32 %v451, 0.0
      %v468 = vmax.f32 %v452, 0.0
      %v469 = vmax.f32 %v453, 0.0
      %v470 = vmax.f32 %v454, 0.0
      %v471 = vmax.f32 %v455, 0.0
      %v472 = vmax.f32 %v456, 0.0
      %v473 = vmax.f32 %v457, 0.0
      %v474 = vmax.f32 %v458, 0.0
      %v475 = vmax.f32 %v459, 0.0
      %v476 = vmax.f32 %v460, 0.0
      %v477 = vmax.f32 %v461, 0.0
      %v478 = vmax.f32 %v462, 0.0
      %v479 = vmax.f32 %v463, 0.0
      %v480 = vmax.f32 %v464, 0.0
      %v481 = vmax.f32 %v465, 0.0
      %v482 = vpack.c.bf16 %v467, %v466
      %v483 = vpack.c.bf16 %v469, %v468
      %v484 = vpack.c.bf16 %v471, %v470
      %v485 = vpack.c.bf16 %v473, %v472
      %v486 = vpack.c.bf16 %v475, %v474
      %v487 = vpack.c.bf16 %v477, %v476
      %v488 = vpack.c.bf16 %v479, %v478
      %v489 = vpack.c.bf16 %v481, %v480
      %v498 = vunpack.c.l.b16 %v482
      %v499 = vunpack.c.h.b16 %v482
      %v500 = vunpack.c.l.b16 %v483
      %v501 = vunpack.c.h.b16 %v483
      %v502 = vunpack.c.l.b16 %v484
      %v503 = vunpack.c.h.b16 %v484
      %v504 = vunpack.c.l.b16 %v485
      %v505 = vunpack.c.h.b16 %v485
      %v506 = vunpack.c.l.b16 %v486
      %v507 = vunpack.c.h.b16 %v486
      %v508 = vunpack.c.l.b16 %v487
      %v509 = vunpack.c.h.b16 %v487
      %v510 = vunpack.c.l.b16 %v488
      %v511 = vunpack.c.h.b16 %v488
      %v512 = vunpack.c.l.b16 %v489
      %v513 = vunpack.c.h.b16 %v489
      %v514 = vpack.c.b16 %v498, %v498
      %v515 = vpack.c.b16 %v499, %v499
      %v516 = vpack.c.b16 %v500, %v500
      %v517 = vpack.c.b16 %v501, %v501
      %v518 = vpack.c.b16 %v502, %v502
      %v519 = vpack.c.b16 %v503, %v503
      %v520 = vpack.c.b16 %v504, %v504
      %v521 = vpack.c.b16 %v505, %v505
      %v522 = vpack.c.b16 %v506, %v506
      %v523 = vpack.c.b16 %v507, %v507
      %v524 = vpack.c.b16 %v508, %v508
      %v525 = vpack.c.b16 %v509, %v509
      %v526 = vpack.c.b16 %v510, %v510
      %v527 = vpack.c.b16 %v511, %v511
      %v528 = vpack.c.b16 %v512, %v512
      %v529 = vpack.c.b16 %v513, %v513
      %546 = vst [vmem:[#allocation3] sm:$0xf] %v514
      %547 = vst [vmem:[#allocation3 + $0x4] sm:$0xf] %v515
      %548 = vst [vmem:[#allocation3 + $0x8] sm:$0xf] %v516
      %549 = vst [vmem:[#allocation3 + $0xc] sm:$0xf] %v517
      %550 = vst [vmem:[#allocation3 + $0x10] sm:$0xf] %v518
      %551 = vst [vmem:[#allocation3 + $0x14] sm:$0xf] %v519
      %552 = vst [vmem:[#allocation3 + $0x18] sm:$0xf] %v520
      %553 = vst [vmem:[#allocation3 + $0x1c] sm:$0xf] %v521
      %554 = vst [vmem:[#allocation3 + $0x20] sm:$0xf] %v522
      %555 = vst [vmem:[#allocation3 + $0x24] sm:$0xf] %v523
      %556 = vst [vmem:[#allocation3 + $0x28] sm:$0xf] %v524
      %557 = vst [vmem:[#allocation3 + $0x2c] sm:$0xf] %v525
      %558 = vst [vmem:[#allocation3 + $0x30] sm:$0xf] %v526
      %559 = vst [vmem:[#allocation3 + $0x34] sm:$0xf] %v527
      %560 = vst [vmem:[#allocation3 + $0x38] sm:$0xf] %v528
      %561 = vst [vmem:[#allocation3 + $0x3c] sm:$0xf] %v529
    $region25: #{tpu_custom_call.1} parent=1 // pred_fallthru
      _
    // Predicated region
    $region26: #{tpu_custom_call.1} parent=1 // pred_check
      _
    $region27: #{tpu_custom_call.1} parent=1 // pred_check_branch
      %563 = sbr.rel (0) target = $region29
    $region28: #{tpu_custom_call.1} parent=1 // pred_region
      %s565 = ssub.s32 1024, 1024
      %566 = vsyncadd [#allocation4], %s565
      %s567 = sshll.u32 [#allocation3], 4
      %s568 = int_to_ptr.vmem [resolvable:$true] %s567
      %573 = dma.vmem_to_hbm [thread:$0]  %s568, 1024, %s4, [#allocation4], 64, 64, 4
    $region29: #{tpu_custom_call.1} parent=1 // pred_fallthru
      _
    // Predicated region
    $region30: #{tpu_custom_call.1} parent=1 // pred_check
      _
    $region31: #{tpu_custom_call.1} parent=1 // pred_check_branch
      %575 = sbr.rel (0) target = $region33
    $region32: #{tpu_custom_call.1} parent=1 // pred_region
      %576 = dma.done [#allocation4], 1024
    $region33: #{tpu_custom_call.1} parent=1 // pred_fallthru
      _
    %577 = vsyncpa [#allocation4], 1

</llo_original>
